<compile_context>
chip_gen: v7x
topology: tpu7x:2x2x1
jax: 0.10.0
libtpu: 0.0.40
codegen_flags: <defaults>
</compile_context>

<pallas_src>
import jax
import jax.numpy as jnp
from jax.experimental import pallas as pl
from jax.experimental.pallas import tpu as pltpu


def _conv_tile_kernel(x_ref, w_ref, o_ref):
    # x_ref: (TT, 2C)  time-major activation tile, both taps stacked on channels
    # w_ref: (2C, C)   fused weight  [W0^T ; W1^T]
    # o_ref: (TT, C)   time-major output tile (lane-dense in C)
    o_ref[...] = jnp.dot(
        x_ref[...], w_ref[...], preferred_element_type=jnp.float32
    ).astype(o_ref.dtype)


def _round_up(v, m):
    return ((v + m - 1) // m) * m


def dilated_causal_conv1d(x, weight, dilation=1, *, time_tile=512,
                          compute_dtype=None):
    """WaveNet dilated causal conv (kernel_size=2, no padding, no bias).

    x:      (N, C, T)  activations, PyTorch NCW layout.
    weight: (C, C, 2)  Conv1d weight (C_out, C_in, K=2).
    Returns (N, C, T - dilation), matching nn.Conv1d(C, C, 2, dilation=d).
    compute_dtype: optionally jnp.bfloat16 to run the MXU in bf16 (accumulation
                   stays f32); default keeps the input dtype exactly.
    """
    N, C, T = x.shape
    assert weight.shape == (C, C, 2)
    t_out = T - dilation
    assert t_out > 0, "input too short for this dilation"

    # ---- wrapper-side layout plumbing (plain XLA ops, outside the kernel) ----
    x_tm = jnp.transpose(x, (0, 2, 1))                              # (N, T, C)
    # Both conv taps, shifted by `dilation`, stacked along the channel axis.
    # Doing the shift here keeps both views offset-0 aligned in VMEM (no
    # unaligned in-kernel lane/sublane slice) and fuses the two taps into one
    # matmul with K = 2C.
    x_cat = jnp.concatenate(
        [x_tm[:, 0:t_out, :], x_tm[:, dilation:dilation + t_out, :]], axis=-1
    )                                                               # (N, T_out, 2C)
    # out = x_left @ W0^T + x_right @ W1^T = x_cat @ [W0^T ; W1^T]
    w_cat = jnp.concatenate(
        [jnp.transpose(weight[:, :, 0]), jnp.transpose(weight[:, :, 1])], axis=0
    )                                                               # (2C, C)

    if compute_dtype is not None:
        x_cat = x_cat.astype(compute_dtype)
        w_cat = w_cat.astype(compute_dtype)

    # ---- time tiling (VMEM use independent of T) ----
    tt = min(int(time_tile), _round_up(t_out, 8))
    tt = _round_up(tt, 8)
    t_pad = _round_up(t_out, tt)
    if t_pad != t_out:
        # Zero-pad the tail so the last tile is full; padded rows are sliced
        # off after the kernel.
        x_cat = jnp.pad(x_cat, ((0, 0), (0, t_pad - t_out), (0, 0)))

    grid = (N, t_pad // tt)

    out_tm = pl.pallas_call(
        _conv_tile_kernel,
        out_shape=jax.ShapeDtypeStruct((N, t_pad, C), x.dtype),
        grid_spec=pltpu.PrefetchScalarGridSpec(
            num_scalar_prefetch=0,
            grid=grid,
            in_specs=[
                # One (TT, 2C) time tile per step; batch dim squeezed away.
                pl.BlockSpec((pl.Squeezed(), tt, 2 * C), lambda b, t: (b, t, 0)),
                # Fused weight, resident across all steps.
                pl.BlockSpec((2 * C, C), lambda b, t: (0, 0)),
            ],
            out_specs=pl.BlockSpec((pl.Squeezed(), tt, C), lambda b, t: (b, t, 0)),
        ),
        compiler_params=pltpu.CompilerParams(
            dimension_semantics=("parallel", "parallel")),
    )(x_cat, w_cat)

    # back to PyTorch NCW layout
    return jnp.transpose(out_tm[:, :t_out, :], (0, 2, 1))


def _reference(x, weight, dilation):
    # Pure-JAX reference of the PyTorch forward (for correctness check).
    t_out = x.shape[-1] - dilation
    w0 = weight[:, :, 0]
    w1 = weight[:, :, 1]
    return (jnp.einsum("oc,nct->not", w0, x[:, :, :t_out]) +
            jnp.einsum("oc,nct->not", w1, x[:, :, dilation:dilation + t_out]))


if __name__ == "__main__":
    key = jax.random.PRNGKey(0)
    kx, kw = jax.random.split(key)

    N, C, T = 2, 4, 16
    dilation = 2

    x = jax.random.normal(kx, (N, C, T), dtype=jnp.float32)
    # Conv1d-layout weights (C_out, C_in, K=2).
    weight = jax.random.normal(kw, (C, C, 2), dtype=jnp.float32)

    ref = _reference(x, weight, dilation)

    # Default tile (single time tile at this tiny T).
    out = dilated_causal_conv1d(x, weight, dilation=dilation)
    out = jax.block_until_ready(out)
    assert out.shape == (N, C, T - dilation)
    assert jnp.allclose(out, ref, atol=1e-5, rtol=1e-5)

    # Force multiple time tiles + tail padding path to exercise the tiling.
    out_tiled = dilated_causal_conv1d(x, weight, dilation=dilation, time_tile=8)
    out_tiled = jax.block_until_ready(out_tiled)
    assert jnp.allclose(out_tiled, ref, atol=1e-5, rtol=1e-5)

    print("KERNEL_OK")
</pallas_src>

<mosaic_0001>
module attributes {stable_mosaic.version = 11 : i64} {
  func.func @_conv_tile_kernel(%arg0: i32, %arg1: i32, %arg2: memref<1x16x8xf32, #tpu.memory_space<vmem>>, %arg3: memref<8x4xf32, #tpu.memory_space<vmem>>, %arg4: memref<1x16x4xf32, #tpu.memory_space<vmem>>) attributes {dimension_semantics = [#tpu.dimension_semantics<parallel>, #tpu.dimension_semantics<parallel>], iteration_bounds = array<i64: 2, 1>, scalar_prefetch = 0 : i64, scratch_operands = 0 : i64, tpu.core_type = #tpu.core_type<tc>, window_params = [{transform_indices = @transform_0, window_bounds = array<i64: 1, 16, 8>}, {pipeline_mode = #tpu.pipeline_mode<synchronous>, transform_indices = @transform_1, window_bounds = array<i64: 8, 4>}, {transform_indices = @transform_2, window_bounds = array<i64: 1, 16, 4>}]} {
    %c0 = arith.constant 0 : index
    %c0_0 = arith.constant 0 : index
    %c0_1 = arith.constant 0 : index
    %0 = vector.load %arg2[%c0, %c0_0, %c0_1] : memref<1x16x8xf32, #tpu.memory_space<vmem>>, vector<1x16x8xf32>
    %1 = vector.shape_cast %0 : vector<1x16x8xf32> to vector<16x8xf32>
    %c0_2 = arith.constant 0 : index
    %c0_3 = arith.constant 0 : index
    %2 = vector.load %arg3[%c0_2, %c0_3] : memref<8x4xf32, #tpu.memory_space<vmem>>, vector<8x4xf32>
    %cst = arith.constant dense<0.000000e+00> : vector<16x4xf32>
    %3 = tpu.matmul %1, %2, %cst {dimension_numbers = #tpu.dot_dimension_numbers<[1], [0], [0], [1], [0, 0, 1, 1], [], []>} : vector<16x8xf32>, vector<8x4xf32>, vector<16x4xf32> -> vector<16x4xf32>
    %c0_4 = arith.constant 0 : index
    %c0_5 = arith.constant 0 : index
    %c0_6 = arith.constant 0 : index
    %4 = vector.load %arg4[%c0_4, %c0_5, %c0_6] : memref<1x16x4xf32, #tpu.memory_space<vmem>>, vector<1x16x4xf32>
    %5 = vector.shape_cast %4 : vector<1x16x4xf32> to vector<16x4xf32>
    %6 = vector.shape_cast %3 : vector<16x4xf32> to vector<1x16x4xf32>
    tpu.vector_store %arg4[%c0_4, %c0_5, %c0_6], %6 {strides = array<i32>} : memref<1x16x4xf32, #tpu.memory_space<vmem>>, vector<1x16x4xf32>,
    return
  }
  func.func @transform_0(%arg0: i32, %arg1: i32) -> (i32, i32, i32) {
    %c0_i32 = arith.constant 0 : i32
    %c0_i32_0 = arith.constant 0 : i32
    return %arg0, %arg1, %c0_i32 : i32, i32, i32
  }
  func.func @transform_1(%arg0: i32, %arg1: i32) -> (i32, i32) {
    %c0_i32 = arith.constant 0 : i32
    %c0_i32_0 = arith.constant 0 : i32
    %c0_i32_1 = arith.constant 0 : i32
    return %c0_i32, %c0_i32_0 : i32, i32
  }
  func.func @transform_2(%arg0: i32, %arg1: i32) -> (i32, i32, i32) {
    %c0_i32 = arith.constant 0 : i32
    %c0_i32_0 = arith.constant 0 : i32
    return %arg0, %arg1, %c0_i32 : i32, i32, i32
  }
}

</mosaic_0001>

<llo_original>
// kernel: tpu_custom_call.1
$region0: #{tpu_custom_call.1}
  #allocation0 [shape = 'u32[]', space=smem, size = 0x4, offset = 0x4, fixed_abs, tag = 'smem constant byte address 0x4 - core index']
  #allocation1 [shape = 'u32[144,128]{1,0:T(1,128)}', space=vmem, size = 0x12000, scoped, tag = 'internal scratch']
  %s0 = inlined_call_operand.vmem [shape: f32[2,16,8], index: 0, kind: input, shape index: {}]
  %s1 = inlined_call_operand.vmem [shape: f32[8,4], index: 1, kind: input, shape index: {}]
  %s2 = inlined_call_operand.vmem [shape: f32[2,16,4], index: 2, kind: output, shape index: {}]
  %s3 = sld [smem:[#allocation0]]
  $region41: #{tpu_custom_call.1} parent=0
    _
  %s5 = ssub.s32 1, %s3
  %s6 = scalar_select 0, %s5, %s3
  loop: start=0, step=1, limit=4
  $region2: #{tpu_custom_call.1} parent=0 // loop_pre_header
    _
  $region3: #{tpu_custom_call.1} parent=0 // loop_header
    %s8 = sphi 0, %s12
    %p9 = scmp.ge.s32.totalorder %s8, 4
    %s15 = sphi 0, %s27
    %s16 = sphi 0, %s23
    %s17 = sphi 0, %s15
    %s18 = sphi 0, %s16
    %s19 = sphi 0, %s17
    %s20 = sphi 0, %s18
    %s32 = sphi 0, %s34
    %s35 = sphi 0, %s32
    %s36 = sphi 0, %s35
    %s52 = sphi 0, %s36
    %s56 = sphi 0, %s56
    %s58 = sphi 0, %s56
    %s59 = sphi 0, %s58
    %s73 = sphi 0, %s59
    %s81 = sphi 0, %s83
    %s84 = sphi 0, %s81
    %s85 = sphi 0, %s84
    %s101 = sphi 0, %s85
  $region4: #{tpu_custom_call.1} parent=0 // loop_header_branch
    %11 = sbr.rel (%p9) target = $region8
  $region5: #{tpu_custom_call.1} parent=0 // loop_body
    %s13 = ssub.s32 %s8, 1
    %s14 = ssub.s32 %s8, 2
    %s21 = sadd.s32 1, %s16
    %p22 = scmp.ge.s32.totalorder %s21, 1
    %s23 = scalar_select %p22, 0, %s21
    %s24 = sadd.s32 1, %s15
    %s25 = scalar_select %p22, %s24, %s15
    %p26 = scmp.ge.s32.totalorder %s25, 2
    %s27 = scalar_select %p26, 0, %s25
    %s28 = ssub.s32 %s15, %s27
    %s29 = ssub.s32 %s16, %s23
    %s30 = sor.u32 %s28, %s29
    %p31 = scmp.eq.s32.totalorder %s30, 0
    %s33 = sadd.s32 %s32, 1
    %s34 = scalar_select %p31, %s32, %s33
    %p37 = pneg %p31
    %p38 = scmp.eq.s32.totalorder %s8, 1
    %p39 = por %p37, %p38
    %p40 = scmp.ne.s32.totalorder %s32, %s35
    %p41 = scmp.eq.s32.totalorder %s8, 0
    %p42 = por %p40, %p41
    %p43 = scmp.ne.s32.totalorder %s32, %s35
    %p44 = scmp.eq.s32.totalorder %s13, 1
    %p45 = por %p43, %p44
    %p46 = scmp.ne.s32.totalorder %s35, %s36
    %p47 = scmp.eq.s32.totalorder %s13, 0
    %p48 = por %p46, %p47
    %p49 = scmp.ne.s32.totalorder %s35, %s36
    %p50 = scmp.eq.s32.totalorder %s14, 1
    %p51 = por %p49, %p50
    %p53 = scmp.ne.s32.totalorder %s36, %s52
    %p54 = scmp.eq.s32.totalorder %s14, 0
    %p55 = por %p53, %p54
    %s57 = sadd.s32 %s56, 1
    %p60 = scmp.eq.s32.totalorder %s8, 1
    %p61 = scmp.ne.s32.totalorder %s56, %s58
    %p62 = scmp.eq.s32.totalorder %s8, 0
    %p63 = por %p61, %p62
    %p64 = scmp.ne.s32.totalorder %s56, %s58
    %p65 = scmp.eq.s32.totalorder %s13, 1
    %p66 = por %p64, %p65
    %p67 = scmp.ne.s32.totalorder %s58, %s59
    %p68 = scmp.eq.s32.totalorder %s13, 0
    %p69 = por %p67, %p68
    %p70 = scmp.ne.s32.totalorder %s58, %s59
    %p71 = scmp.eq.s32.totalorder %s14, 1
    %p72 = por %p70, %p71
    %p74 = scmp.ne.s32.totalorder %s59, %s73
    %p75 = scmp.eq.s32.totalorder %s14, 0
    %p76 = por %p74, %p75
    %s77 = ssub.s32 %s15, %s27
    %s78 = ssub.s32 %s16, %s23
    %s79 = sor.u32 %s77, %s78
    %p80 = scmp.eq.s32.totalorder %s79, 0
    %s82 = sadd.s32 %s81, 1
    %s83 = scalar_select %p80, %s81, %s82
    %p86 = pneg %p80
    %p87 = scmp.eq.s32.totalorder %s8, 1
    %p88 = por %p86, %p87
    %p89 = scmp.ne.s32.totalorder %s81, %s84
    %p90 = scmp.eq.s32.totalorder %s8, 0
    %p91 = por %p89, %p90
    %p92 = scmp.ne.s32.totalorder %s81, %s84
    %p93 = scmp.eq.s32.totalorder %s13, 1
    %p94 = por %p92, %p93
    %p95 = scmp.ne.s32.totalorder %s84, %s85
    %p96 = scmp.eq.s32.totalorder %s13, 0
    %p97 = por %p95, %p96
    %p98 = scmp.ne.s32.totalorder %s84, %s85
    %p99 = scmp.eq.s32.totalorder %s14, 1
    %p100 = por %p98, %p99
    %p102 = scmp.ne.s32.totalorder %s85, %s101
    %p103 = scmp.eq.s32.totalorder %s14, 0
    %p104 = por %p102, %p103
    %p105 = scmp.le.s32.totalorder 1, %s8
    %p106 = scmp.lt.s32.totalorder %s8, 3
    %p107 = pnand %p105, %p106
    %p108 = pneg %p107
    // Predicated region
    $region9: #{tpu_custom_call.1} parent=5 // pred_check
      _
    $region10: #{tpu_custom_call.1} parent=5 // pred_check_branch
      %110 = sbr.rel (%p107) target = $region12
    $region11: #{tpu_custom_call.1} parent=5 // pred_region
      %s111 = ssub.s32 %s8, 1
      // Predicated region
      $region13: #{tpu_custom_call.1} parent=11 // pred_check
        %p112 = pneg %p69
      $region14: #{tpu_custom_call.1} parent=11 // pred_check_branch
        %114 = sbr.rel (%p112) target = $region16
      $region15: #{tpu_custom_call.1} parent=11 // pred_region
        _
      $region16: #{tpu_custom_call.1} parent=11 // pred_fallthru
        _
    $region12: #{tpu_custom_call.1} parent=5 // pred_fallthru
      _
    %p115 = scmp.lt.s32.totalorder %s8, 2
    // Predicated region
    $region17: #{tpu_custom_call.1} parent=5 // pred_check
      %p116 = pneg %p115
    $region18: #{tpu_custom_call.1} parent=5 // pred_check_branch
      %118 = sbr.rel (%p116) target = $region20
    $region19: #{tpu_custom_call.1} parent=5 // pred_region
      // Predicated region
      $region21: #{tpu_custom_call.1} parent=19 // pred_check
        %p119 = pneg %p42
      $region22: #{tpu_custom_call.1} parent=19 // pred_check_branch
        %121 = sbr.rel (%p119) target = $region24
      $region23: #{tpu_custom_call.1} parent=19 // pred_region
        %s122 = smul.u32 2, %s16
        %p123 = scmp.lt.s32.totalorder %s15, 1
        %s124 = scalar_select %p123, %s15, 1
        %p125 = scmp.lt.s32.totalorder %s122, 1
        %s126 = scalar_select %p125, %s122, 1
        %s127 = smul.addr %s124, 2
        %s128 = sadd.s32 %s126, %s127
        %s129 = smul.addr %s128, 8
        %s130 = scalar_lea.vmem %s0, %s129
        %s131 = smul.u32 2, %s16
      $region24: #{tpu_custom_call.1} parent=19 // pred_fallthru
        _
    $region20: #{tpu_custom_call.1} parent=5 // pred_fallthru
      _
    %p132 = scmp.le.s32.totalorder 1, %s8
    %p133 = scmp.lt.s32.totalorder %s8, 3
    %p134 = pnand %p132, %p133
    %p135 = pneg %p134
    // Predicated region
    $region25: #{tpu_custom_call.1} parent=5 // pred_check
      _
    $region26: #{tpu_custom_call.1} parent=5 // pred_check_branch
      %137 = sbr.rel (%p134) target = $region28
    $region27: #{tpu_custom_call.1} parent=5 // pred_region
      %s138 = ssub.s32 %s8, 1
      %s139 = smul.u32 2, %s18
      %p140 = scmp.lt.s32.totalorder %s17, 1
      %s141 = scalar_select %p140, %s17, 1
      %p142 = scmp.lt.s32.totalorder %s139, 1
      %s143 = scalar_select %p142, %s139, 1
      %s144 = smul.addr %s141, 2
      %s145 = sadd.s32 %s143, %s144
      %s146 = smul.addr %s145, 8
      %s147 = scalar_lea.vmem %s0, %s146
      %p148 = pneg %p48
      %p149 = pneg %p45
      %p150 = pneg %p69
      %p151 = pneg %p66
      %p152 = pneg %p97
      %p153 = pneg %p94
      %s154 = smul.u32 2, %s18
      %p155 = scmp.lt.s32.totalorder %s17, 1
      %s156 = scalar_select %p155, %s17, 1
      %p157 = scmp.lt.s32.totalorder %s154, 1
      %s158 = scalar_select %p157, %s154, 1
      %s159 = smul.addr %s156, 2
      %s160 = sadd.s32 %s158, %s159
      %s161 = smul.addr %s160, 8
      %s162 = scalar_lea.vmem %s2, %s161
      %s163 = smul.u32 2, %s18
      %p164 = scmp.lt.s32.totalorder %s17, 1
      %s165 = scalar_select %p164, %s17, 1
      %p166 = scmp.lt.s32.totalorder %s163, 1
      %s167 = scalar_select %p166, %s163, 1
      %s168 = smul.addr %s165, 2
      %s169 = sadd.s32 %s167, %s168
      %s170 = smul.addr %s169, 8
      %s171 = scalar_lea.vmem %s0, %s170
      %s172 = smul.u32 2, %s18
      %s173 = smul.u32 2, %s18
      %p174 = scmp.lt.s32.totalorder %s17, 1
      %s175 = scalar_select %p174, %s17, 1
      %p176 = scmp.lt.s32.totalorder %s173, 1
      %s177 = scalar_select %p176, %s173, 1
      %s178 = smul.addr %s175, 2
      %s179 = sadd.s32 %s177, %s178
      %s180 = smul.addr %s179, 8
      %s181 = scalar_lea.vmem %s2, %s180
      %s182 = smul.u32 2, %s18
      %v183 = vld [vmem:[%s171] sm:$0xff]
      %v184 = vld [vmem:[%s171 + $0x8] sm:$0xff]
      %v185 = vld [vmem:[%s1] sm:$0xff]
      %vm186 = vcmask 64512
      %v188 = vsel %vm186, %v183, 0
      %v191 = vsel %vm186, %v184, 0
      %193 = vmatprep.subr.mxu0 0.0
      %194 = vmatpush1.msra.mxu0 %v185
      %195 = vmatprep.subr.mxu0 0.0
      %196 = vmatpush1.msra.mxu0 0.0
      %197 = vmatprep.subr.mxu0 0.0
      %198 = vmatpush1.msra.mxu0 0.0
      %199 = vmatprep.subr.mxu0 0.0
      %200 = vmatpush1.msra.mxu0 0.0
      %201 = vmatprep.subr.mxu0 0.0
      %202 = vmatpush1.msra.mxu0 0.0
      %203 = vmatprep.subr.mxu0 0.0
      %204 = vmatpush1.msra.mxu0 0.0
      %205 = vmatprep.subr.mxu0 0.0
      %206 = vmatpush1.msra.mxu0 0.0
      %207 = vmatprep.subr.mxu0 0.0
      %208 = vmatpush1.msra.mxu0 0.0
      %209 = vmatprep.subr.mxu0 0.0
      %210 = vmatpush1.msra.mxu0 0.0
      %211 = vmatprep.subr.mxu0 0.0
      %212 = vmatpush1.msra.mxu0 0.0
      %213 = vmatprep.subr.mxu0 0.0
      %214 = vmatpush1.msra.mxu0 0.0
      %215 = vmatprep.subr.mxu0 0.0
      %216 = vmatpush1.msra.mxu0 0.0
      %217 = vmatprep.subr.mxu0 0.0
      %218 = vmatpush1.msra.mxu0 0.0
      %219 = vmatprep.subr.mxu0 0.0
      %220 = vmatpush1.msra.mxu0 0.0
      %221 = vmatprep.subr.mxu0 0.0
      %222 = vmatpush1.msra.mxu0 0.0
      %223 = vmatprep.subr.mxu0 0.0
      %224 = vmatpush1.msra.mxu0 0.0
      %225 = vmatprep.subr.mxu0 0.0
      %226 = vmatpush1.msra.mxu0 0.0
      %227 = vmatprep.subr.mxu0 0.0
      %228 = vmatpush1.msra.mxu0 0.0
      %229 = vmatprep.subr.mxu0 0.0
      %230 = vmatpush1.msra.mxu0 0.0
      %231 = vmatprep.subr.mxu0 0.0
      %232 = vmatpush1.msra.mxu0 0.0
      %233 = vmatprep.subr.mxu0 0.0
      %234 = vmatpush1.msra.mxu0 0.0
      %235 = vmatprep.subr.mxu0 0.0
      %236 = vmatpush1.msra.mxu0 0.0
      %237 = vmatprep.subr.mxu0 0.0
      %238 = vmatpush1.msra.mxu0 0.0
      %239 = vmatprep.subr.mxu0 0.0
      %240 = vmatpush1.msra.mxu0 0.0
      %241 = vmatprep.subr.mxu0 0.0
      %242 = vmatpush1.msra.mxu0 0.0
      %243 = vmatprep.subr.mxu0 0.0
      %244 = vmatpush1.msra.mxu0 0.0
      %245 = vmatprep.subr.mxu0 0.0
      %246 = vmatpush1.msra.mxu0 0.0
      %247 = vmatprep.subr.mxu0 0.0
      %248 = vmatpush1.msra.mxu0 0.0
      %249 = vmatprep.subr.mxu0 0.0
      %250 = vmatpush1.msra.mxu0 0.0
      %251 = vmatprep.subr.mxu0 0.0
      %252 = vmatpush1.msra.mxu0 0.0
      %253 = vmatprep.subr.mxu0 0.0
      %254 = vmatpush1.msra.mxu0 0.0
      %255 = vmatprep.subr.mxu0 0.0
      %256 = vmatpush1.msra.mxu0 0.0
      %257 = vmatprep.mubr.f32.mxu0 0.0
      %258 = vmatmul.mubr.f32.gmra.mrb[0].mxu0 %v188
      %v259 = vpop.f32.mrb[0].mxu0
      %v260 = vadd.f32 0.0, %v259
      %v261 = vpop.f32.mrb[0].mxu0
      %262 = vmatprep.mubr.f32.mxu0 0.0
      %263 = vmatmul.mubr.f32.gmra.mrb[0].mxu0 %v191
      %v264 = vpop.f32.mrb[0].mxu0
      %v265 = vadd.f32 0.0, %v264
      %v266 = vpop.f32.mrb[0].mxu0
      %267 = vdwg.mxu0
      %vm268 = vcmask 31744
      %269 = vst.msk [vmem:[%s181] sm:$0xff] %vm268, %v260
      %270 = vst.msk [vmem:[%s181 + $0x8] sm:$0xff] %vm268, %v265
      %s271 = smul.u32 2, %s18
      %p272 = scmp.lt.s32.totalorder %s17, 1
      %s273 = scalar_select %p272, %s17, 1
      %p274 = scmp.lt.s32.totalorder %s271, 1
      %s275 = scalar_select %p274, %s271, 1
      %s276 = smul.addr %s273, 2
      %s277 = sadd.s32 %s275, %s276
      %s278 = smul.addr %s277, 8
      %s279 = scalar_lea.vmem %s2, %s278
      // Predicated region
      $region29: #{tpu_custom_call.1} parent=27 // pred_check
        %p280 = pneg %p94
      $region30: #{tpu_custom_call.1} parent=27 // pred_check_branch
        %282 = sbr.rel (%p280) target = $region32
      $region31: #{tpu_custom_call.1} parent=27 // pred_region
        %s283 = smul.u32 2, %s18
      $region32: #{tpu_custom_call.1} parent=27 // pred_fallthru
        _
    $region28: #{tpu_custom_call.1} parent=5 // pred_fallthru
      _
    %p284 = scmp.le.s32.totalorder 2, %s8
    // Predicated region
    $region33: #{tpu_custom_call.1} parent=5 // pred_check
      %p285 = pneg %p284
    $region34: #{tpu_custom_call.1} parent=5 // pred_check_branch
      %287 = sbr.rel (%p285) target = $region36
    $region35: #{tpu_custom_call.1} parent=5 // pred_region
      %s288 = ssub.s32 %s8, 2
      // Predicated region
      $region37: #{tpu_custom_call.1} parent=35 // pred_check
        %p289 = pneg %p100
      $region38: #{tpu_custom_call.1} parent=35 // pred_check_branch
        %291 = sbr.rel (%p289) target = $region40
      $region39: #{tpu_custom_call.1} parent=35 // pred_region
        %s292 = smul.u32 2, %s20
        %p293 = scmp.lt.s32.totalorder %s19, 1
        %s294 = scalar_select %p293, %s19, 1
        %p295 = scmp.lt.s32.totalorder %s292, 1
        %s296 = scalar_select %p295, %s292, 1
        %s297 = smul.addr %s294, 2
        %s298 = sadd.s32 %s296, %s297
        %s299 = smul.addr %s298, 8
        %s300 = scalar_lea.vmem %s2, %s299
      $region40: #{tpu_custom_call.1} parent=35 // pred_fallthru
        _
    $region36: #{tpu_custom_call.1} parent=5 // pred_fallthru
      _
  $region6: #{tpu_custom_call.1} parent=0 // loop_footer
    %s12 = sadd.s32 1, %s8
  $region7: #{tpu_custom_call.1} parent=0 // loop_footer_branch
    %7 = sbr.rel target = $region3
  $region8: #{tpu_custom_call.1} parent=0 // loop_exit
    _

</llo_original>
